<compile_context>
chip_gen: v7x
topology: tpu7x:2x2x1
jax: 0.10.0
libtpu: 0.0.40
codegen_flags: <defaults>
</compile_context>

<pallas_src>
import jax
import jax.numpy as jnp
from jax.experimental import pallas as pl
from jax.experimental.pallas import tpu as pltpu


def _round_up(v, m):
    return ((v + m - 1) // m) * m


def _cdiv(a, b):
    return -(-a // b)


_FAST_PATH_WEIGHT_ELEMS = 128 * 1024      # below this, a fused XLA dot wins
_X_RESIDENT_BYTES = 4 * 1024 * 1024       # keep x fully in VMEM below this


def _vmem_budget():
    """Returns (physical VMEM bytes, weight-tile budget bytes), generation aware."""
    try:
        cap = int(pltpu.get_tpu_info().vmem_capacity_bytes)
    except Exception:
        cap = 64 * 1024 * 1024            # conservative (v7x-sized) fallback
    # Weight working-set budget: ~half the chip, capped so that 128 MiB parts
    # (v5e/v6e) take big tiles while 64 MiB parts (v7x) keep the total
    # double-buffered footprint comfortably under ~48 MiB.
    return cap, min(cap // 2, 48 * 1024 * 1024)


def _pick_tn(n_pad):
    # Largest lane-dense N tile that still leaves >= 2 tiles on the parallel
    # axis, so both v7x TensorCores get a disjoint half of the weight stream.
    for cand in (512, 256, 128):
        if n_pad % cand == 0 and n_pad // cand >= 2:
            return cand
    # TODO(synk): when n_pad == 128 only one N tile exists; splitting K over a
    # leading parallel axis (two partial sums combined in the wrapper) would
    # re-enable megacore sharding for small-N configs.
    return 128


def _plan_k_pad(k_in, tn, w_itemsize, quantized, budget):
    """K padding used when the weight is prepared (pads by < 128*nsteps)."""
    k_round = _round_up(k_in, 128)
    # Bytes per K column of the weight working set: double-buffered stored
    # tile plus (if quantised) the bf16 dequantised temporary.
    per_col = 2 * tn * w_itemsize + (2 * tn if quantized else 0)
    tk_max = max(128, (budget // per_col) // 128 * 128)
    nsteps = _cdiv(k_round, tk_max)
    tk = _round_up(_cdiv(k_round, nsteps), 128)
    return nsteps * tk


def _pick_tk(k_pad, tn, w_itemsize, quantized, budget):
    """Largest K tile (multiple of 128) that exactly divides the stored k_pad
    and whose double-buffered weight stream (+ dequant temp) fits the budget."""
    per_col = 2 * tn * w_itemsize + (2 * tn if quantized else 0)
    qmax = max(1, (budget // per_col) // 128)
    q_total = k_pad // 128
    for cand in range(min(qmax, q_total), 0, -1):
        if q_total % cand == 0:
            return 128 * cand
    return 128


def prepare_weight(weight_nk, *, quantize=True):
    """ONE-TIME weight preprocessing (call from init, never per forward step).

    weight_nk: (out_features=h*w, in_features=d*h*w) nn.Linear weight.
    Returns:
      w_kernel: (k_pad, n_pad) weight in MXU-native (K, N) layout, zero padded
                to the tiling plan; int8 if quantize else bfloat16.
      scale:    (1, n_pad) float32 per-output-column dequantisation scale
                (ones for the bfloat16 path).
    """
    n_out, k_in = weight_nk.shape
    w_itemsize = 1 if quantize else 2
    _, budget = _vmem_budget()
    n_pad = _round_up(n_out, 128)
    tn = _pick_tn(n_pad)
    k_pad = _plan_k_pad(k_in, tn, w_itemsize, quantize, budget)

    w_kn = jnp.asarray(weight_nk, jnp.float32).T                    # (K, N), one time
    w_kn = jnp.pad(w_kn, ((0, k_pad - k_in), (0, n_pad - n_out)))
    if quantize:
        # Per-output-column symmetric int8: halves the per-call HBM weight
        # stream on every generation.  Dequantisation happens on-chip, so the
        # MXU only ever sees bf16 (v7x-safe; no integer-MXU requirement).
        amax = jnp.max(jnp.abs(w_kn), axis=0, keepdims=True)
        scale = jnp.where(amax > 0.0, amax / 127.0, 1.0).astype(jnp.float32)
        w_q = jnp.clip(jnp.round(w_kn / scale), -127.0, 127.0).astype(jnp.int8)
        return w_q, scale
    return w_kn.astype(jnp.bfloat16), jnp.ones((1, n_pad), jnp.float32)


def _make_kernel(tk, x_resident, quantized):
    """K-reduction matmul step: o(b, tn) += x(b, tk) @ W(tk, tn)."""

    def kernel(x_ref, w_ref, s_ref, o_ref):
        k = pl.program_id(1)

        @pl.when(k == 0)
        def _():
            o_ref[...] = jnp.zeros_like(o_ref)

        if x_resident:
            start = pl.multiple_of(k * tk, tk)
            x_tile = x_ref[:, pl.ds(start, tk)]
        else:
            x_tile = x_ref[...]

        w_tile = w_ref[...]
        if quantized:
            # On-chip dequant (VPU, hidden under the weight DMA): HBM streams
            # int8, the MXU sees bf16.
            w_tile = w_tile.astype(jnp.bfloat16)

        # Weight is already stored (K, N): plain dot, no transposed operand.
        o_ref[...] += jnp.dot(x_tile, w_tile, preferred_element_type=jnp.float32)

        @pl.when(k == pl.num_programs(1) - 1)
        def _():
            # Per-output-column dequant scale (all-ones for the bf16 path).
            o_ref[...] *= s_ref[...]

    return kernel


def mag_forward(x, weight, out_size, scale=None):
    """Pallas implementation of MagForward.forward.

    x:       (B, 1, D, H, W) float
    weight:  preferably the (k_pad, n_pad) kernel-layout array from
             prepare_weight()/init (zero per-call weight copies).  A raw
             (H*W, D*H*W) float nn.Linear weight is also accepted as a slow
             per-call-converted fallback (only when scale is None).
    scale:   (1, n_pad) float32 per-output-column scale from prepare_weight().
    returns  (B, 1, H, W) float32
    """
    b = x.shape[0]
    assert x.shape[1] == 1, "MagForward assumes the channel dim C == 1"
    h, w = out_size
    n_out = h * w
    k_in = x.shape[2] * x.shape[3] * x.shape[4]
    assert n_out == x.shape[3] * x.shape[4]

    # Slow convenience fallback: raw nn.Linear layout -> convert per call.
    if scale is None and weight.shape == (n_out, k_in) and weight.dtype != jnp.int8:
        weight, scale = prepare_weight(weight, quantize=False)

    k_pad, n_pad = weight.shape
    assert (k_pad % 128 == 0 and n_pad % 128 == 0
            and k_pad >= k_in and n_pad >= n_out), (
        "weight must be the (k_pad, n_pad) kernel-layout array from prepare_weight()")
    quantized = weight.dtype == jnp.int8
    if scale is None:
        scale = jnp.ones((1, n_pad), jnp.float32)
    w_itemsize = 1 if quantized else jnp.dtype(weight.dtype).itemsize

    x2 = x.reshape(b, k_in)                        # same ordering as torch .view
    if k_pad != k_in:
        # x is tiny; the (large) weight is never padded per call.
        x2 = jnp.pad(x2, ((0, 0), (0, k_pad - k_in)))

    # ---- small-problem fast path: pallas_call fixed overhead would dominate ----
    if n_out * k_in <= _FAST_PATH_WEIGHT_ELEMS:
        w_f = weight.astype(jnp.float32) * scale
        y = x2.astype(jnp.float32) @ w_f
        return y[:, :n_out].reshape(b, 1, h, w)

    cap, budget = _vmem_budget()
    tn = _pick_tn(n_pad)
    tk = _pick_tk(k_pad, tn, w_itemsize, quantized, budget)
    nsteps = k_pad // tk

    x2c = x2.astype(jnp.bfloat16)
    x_res_bytes = b * k_pad * 2
    x_resident = x_res_bytes <= _X_RESIDENT_BYTES    # assumes a modest batch
    if x_resident:
        x_spec = pl.BlockSpec((b, k_pad), lambda j, k: (0, 0))   # stays in VMEM
        x_vmem = x_res_bytes
    else:
        x_spec = pl.BlockSpec((b, tk), lambda j, k: (0, k))
        x_vmem = 2 * b * tk * 2
    w_spec = pl.BlockSpec((tk, tn), lambda j, k: (k, j))         # native (K, N) stream
    s_spec = pl.BlockSpec((1, tn), lambda j, k: (0, j))
    o_spec = pl.BlockSpec((b, tn), lambda j, k: (0, j))          # resident across K

    # vmem_limit derived from the actual double-buffered footprint
    # (stored weight tiles + bf16 dequant temporary + x + output + scale).
    w_vmem = 2 * tk * tn * w_itemsize + (tk * tn * 2 if quantized else 0)
    footprint = w_vmem + x_vmem + 2 * b * tn * 4 + 2 * tn * 4
    vmem_limit = int(min(max(footprint + 8 * 1024 * 1024, 32 * 1024 * 1024),
                         max(cap - 16 * 1024 * 1024, 32 * 1024 * 1024)))

    cost = pl.CostEstimate(
        flops=2 * b * n_pad * k_pad,
        transcendentals=0,
        bytes_accessed=(k_pad * n_pad * w_itemsize + b * k_pad * 2
                        + b * n_pad * 4 + n_pad * 4),
    )

    y = pl.pallas_call(
        _make_kernel(tk, x_resident, quantized),
        out_shape=jax.ShapeDtypeStruct((b, n_pad), jnp.float32),
        grid_spec=pltpu.PrefetchScalarGridSpec(
            num_scalar_prefetch=0,
            grid=(n_pad // tn, nsteps),          # (parallel N tiles, K reduction)
            in_specs=[x_spec, w_spec, s_spec],
            out_specs=o_spec,
        ),
        compiler_params=pltpu.CompilerParams(
            dimension_semantics=("parallel", "arbitrary"),
            vmem_limit_bytes=vmem_limit,
        ),
        cost_estimate=cost,
    )(x2c, weight, scale)

    if n_pad != n_out:
        y = y[:, :n_out]
    return y.reshape(b, 1, h, w)


def init_mag_forward_params(key, in_channels, size, *, quantize=True):
    """Deterministic nn.Linear(in_features, out_features, bias=False) init
    (PyTorch default U(-1/sqrt(in), 1/sqrt(in))), preprocessed ONCE into the
    kernel's streaming layout by prepare_weight().  Returns (w_kernel, scale)."""
    h, w = size
    in_features = h * w * in_channels
    out_features = h * w
    bound = 1.0 / (in_features ** 0.5)
    weight = jax.random.uniform(key, (out_features, in_features), jnp.float32,
                                minval=-bound, maxval=bound)
    # TODO(synk): set_params=True analytic weight fill (fast_calculate /
    # cache_calculate) is a host-side numpy precompute of the constant weight,
    # not part of forward; the default set_params=False random init is used.
    return prepare_weight(weight, quantize=quantize)


if __name__ == "__main__":
    key = jax.random.PRNGKey(0)
    k_w, k_x = jax.random.split(key)

    in_channels = 4          # d
    size = (16, 16)          # (h, w) -> in_features = 4*16*16 = 1024, out = 256
    batch = 2

    w_kernel, w_scale = init_mag_forward_params(k_w, in_channels, size)
    x = jax.random.normal(
        k_x, (batch, 1, in_channels, size[0], size[1]), dtype=jnp.float32)

    y = mag_forward(x, w_kernel, size, w_scale)
    y = jax.block_until_ready(y)
    assert y.shape == (batch, 1, size[0], size[1])

    # Reference: same quantised weight (dequantised in f32), bf16-rounded x,
    # f32 accumulation.
    n_out = size[0] * size[1]
    k_in = in_channels * n_out
    w_deq = w_kernel.astype(jnp.float32) * w_scale               # (k_pad, n_pad)
    x_bf = x.reshape(batch, -1).astype(jnp.bfloat16).astype(jnp.float32)
    x_bf = jnp.pad(x_bf, ((0, 0), (0, w_kernel.shape[0] - k_in)))
    y_ref = (x_bf @ w_deq)[:, :n_out].reshape(batch, 1, size[0], size[1])
    assert jnp.allclose(y, y_ref, atol=1e-2, rtol=1e-2), \
        float(jnp.max(jnp.abs(y - y_ref)))

    print("KERNEL_OK")
</pallas_src>

<mosaic_0001>
module attributes {stable_mosaic.version = 11 : i64} {
  func.func @kernel(%arg0: i32, %arg1: i32, %arg2: memref<2x1024xbf16, #tpu.memory_space<vmem>>, %arg3: memref<1024x128xi8, #tpu.memory_space<vmem>>, %arg4: memref<1x128xf32, #tpu.memory_space<vmem>>, %arg5: memref<2x128xf32, #tpu.memory_space<vmem>>) attributes {dimension_semantics = [#tpu.dimension_semantics<parallel>, #tpu.dimension_semantics<arbitrary>], iteration_bounds = array<i64: 2, 1>, scalar_prefetch = 0 : i64, scratch_operands = 0 : i64, tpu.core_type = #tpu.core_type<tc>, window_params = [{pipeline_mode = #tpu.pipeline_mode<synchronous>, transform_indices = @transform_0, window_bounds = array<i64: 2, 1024>}, {transform_indices = @transform_1, window_bounds = array<i64: 1024, 128>}, {transform_indices = @transform_2, window_bounds = array<i64: 1, 128>}, {transform_indices = @transform_3, window_bounds = array<i64: 2, 128>}]} {
    %c0_i32 = arith.constant 0 : i32
    %0 = arith.cmpi eq, %arg1, %c0_i32 : i32
    %1 = arith.extui %0 : i1 to i32
    %c0_i32_0 = arith.constant 0 : i32
    %2 = arith.cmpi ne, %1, %c0_i32_0 : i32
    scf.if %2 {
      %cst_9 = arith.constant 0.000000e+00 : f32
      %16 = vector.broadcast %cst_9 : f32 to vector<2x128xf32>
      %c0_10 = arith.constant 0 : index
      %c0_11 = arith.constant 0 : index
      %17 = vector.load %arg5[%c0_10, %c0_11] : memref<2x128xf32, #tpu.memory_space<vmem>>, vector<2x128xf32>
      tpu.vector_store %arg5[%c0_10, %c0_11], %16 {strides = array<i32>} : memref<2x128xf32, #tpu.memory_space<vmem>>, vector<2x128xf32>,
    } else {
    }
    %c1024_i32 = arith.constant 1024 : i32
    %3 = arith.muli %arg1, %c1024_i32 : i32
    %4 = tpu.assume_multiple %3, 1024 : i32
    %c0 = arith.constant 0 : index
    %5 = arith.index_cast %4 : i32 to index
    %6 = vector.load %arg2[%c0, %5] : memref<2x1024xbf16, #tpu.memory_space<vmem>>, vector<2x1024xbf16>
    %c0_1 = arith.constant 0 : index
    %c0_2 = arith.constant 0 : index
    %7 = vector.load %arg3[%c0_1, %c0_2] : memref<1024x128xi8, #tpu.memory_space<vmem>>, vector<1024x128xi8>
    %8 = arith.sitofp %7 : vector<1024x128xi8> to vector<1024x128xbf16>
    %c0_3 = arith.constant 0 : index
    %c0_4 = arith.constant 0 : index
    %9 = vector.load %arg5[%c0_3, %c0_4] : memref<2x128xf32, #tpu.memory_space<vmem>>, vector<2x128xf32>
    %cst = arith.constant dense<0.000000e+00> : vector<2x128xf32>
    %10 = tpu.matmul %6, %8, %cst {dimension_numbers = #tpu.dot_dimension_numbers<[1], [0], [0], [1], [0, 0, 1, 1], [], []>} : vector<2x1024xbf16>, vector<1024x128xbf16>, vector<2x128xf32> -> vector<2x128xf32>
    %11 = arith.addf %9, %10 : vector<2x128xf32>
    %c0_5 = arith.constant 0 : index
    %c0_6 = arith.constant 0 : index
    %12 = vector.load %arg5[%c0_5, %c0_6] : memref<2x128xf32, #tpu.memory_space<vmem>>, vector<2x128xf32>
    tpu.vector_store %arg5[%c0_5, %c0_6], %11 {strides = array<i32>} : memref<2x128xf32, #tpu.memory_space<vmem>>, vector<2x128xf32>,
    %c0_i32_7 = arith.constant 0 : i32
    %13 = arith.cmpi eq, %arg1, %c0_i32_7 : i32
    %14 = arith.extui %13 : i1 to i32
    %c0_i32_8 = arith.constant 0 : i32
    %15 = arith.cmpi ne, %14, %c0_i32_8 : i32
    scf.if %15 {
      %c0_9 = arith.constant 0 : index
      %c0_10 = arith.constant 0 : index
      %16 = vector.load %arg5[%c0_9, %c0_10] : memref<2x128xf32, #tpu.memory_space<vmem>>, vector<2x128xf32>
      %c0_11 = arith.constant 0 : index
      %c0_12 = arith.constant 0 : index
      %17 = vector.load %arg4[%c0_11, %c0_12] : memref<1x128xf32, #tpu.memory_space<vmem>>, vector<1x128xf32>
      %18 = vector.broadcast %17 : vector<1x128xf32> to vector<2x128xf32>
      %19 = arith.mulf %16, %18 : vector<2x128xf32>
      %c0_13 = arith.constant 0 : index
      %c0_14 = arith.constant 0 : index
      %20 = vector.load %arg5[%c0_13, %c0_14] : memref<2x128xf32, #tpu.memory_space<vmem>>, vector<2x128xf32>
      tpu.vector_store %arg5[%c0_13, %c0_14], %19 {strides = array<i32>} : memref<2x128xf32, #tpu.memory_space<vmem>>, vector<2x128xf32>,
    } else {
    }
    return
  }
  func.func @transform_0(%arg0: i32, %arg1: i32) -> (i32, i32) {
    %c0_i32 = arith.constant 0 : i32
    %c0_i32_0 = arith.constant 0 : i32
    %c0_i32_1 = arith.constant 0 : i32
    return %c0_i32, %c0_i32_0 : i32, i32
  }
  func.func @transform_1(%arg0: i32, %arg1: i32) -> (i32, i32) {
    %c0_i32 = arith.constant 0 : i32
    return %arg1, %arg0 : i32, i32
  }
  func.func @transform_2(%arg0: i32, %arg1: i32) -> (i32, i32) {
    %c0_i32 = arith.constant 0 : i32
    %c0_i32_0 = arith.constant 0 : i32
    return %c0_i32, %arg0 : i32, i32
  }
  func.func @transform_3(%arg0: i32, %arg1: i32) -> (i32, i32) {
    %c0_i32 = arith.constant 0 : i32
    %c0_i32_0 = arith.constant 0 : i32
    return %c0_i32, %arg0 : i32, i32
  }
}

</mosaic_0001>

<llo_original>
// kernel: tpu_custom_call.1
$region0: #{tpu_custom_call.1}
  #allocation0 [shape = 'u32[]', space=smem, size = 0x4, offset = 0x4, fixed_abs, tag = 'smem constant byte address 0x4 - core index']
  #allocation1 [shape = 'u32[144,128]{1,0:T(1,128)}', space=vmem, size = 0x12000, scoped, tag = 'internal scratch']
  %s0 = inlined_call_operand.hbm [shape: bf16[2,1024], index: 0, kind: input, shape index: {}]
  %s1 = inlined_call_operand.hbm [shape: s8[1024,256], index: 1, kind: input, shape index: {}]
  %s2 = inlined_call_operand.vmem [shape: f32[1,256], index: 2, kind: input, shape index: {}]
  %s3 = inlined_call_operand.hbm [shape: f32[2,256], index: 3, kind: output, shape index: {}]
  %s4 = sld [smem:[#allocation0]]
  $region61: #{tpu_custom_call.1} parent=0
    _
  %s6 = ssub.s32 1, %s4
  %s7 = scalar_select 0, %s6, %s4
  $region1: #{tpu_custom_call.1} parent=0
    #allocation2 [shape = 'u8[4096]{0}', space=vmem, size = 0x1000, scoped, tag = 'input window, operand 0, single buffered']
    #allocation3 [shape = 's32[2]{0}', space=sflag, size = 0x8, scoped, tag = 'scoped memory for tpu_custom_call.1']
    #allocation4 [shape = 's32[2]{0}', space=sflag, size = 0x8, scoped, tag = 'scoped memory for tpu_custom_call.1']
    #allocation5 [shape = 'u8[262144]{0}', space=vmem, size = 0x40000, scoped, tag = 'input window, operand 1']
    #allocation6 [shape = 's32[2]{0}', space=sflag, size = 0x8, scoped, tag = 'scoped memory for tpu_custom_call.1']
    #allocation7 [shape = 'u8[2048]{0}', space=vmem, size = 0x800, scoped, tag = 'output window, operand 0']
    %8 = vsyncpa [#allocation3], 0
    %9 = vsyncpa [#allocation6], 0
    %s10 = scalar_lea.sflag [#allocation6], 1
    %11 = vsyncpa %s10, 0
    %12 = vsyncpa [#allocation4], 0
    %s13 = scalar_lea.sflag [#allocation4], 1
    %14 = vsyncpa %s13, 0
    loop: start=0, step=1, limit=4
    $region2: #{tpu_custom_call.1} parent=1 // loop_pre_header
      _
    $region3: #{tpu_custom_call.1} parent=1 // loop_header
      %s16 = sphi 0, %s20
      %p17 = scmp.ge.s32.totalorder %s16, 4
      %s23 = sphi 0, %s35
      %s24 = sphi 0, %s31
      %s25 = sphi 0, %s23
      %s26 = sphi 0, %s24
      %s27 = sphi 0, %s25
      %s28 = sphi 0, %s26
      %s36 = sphi 0, %s36
      %s38 = sphi 0, %s36
      %s39 = sphi 0, %s38
      %s53 = sphi 0, %s39
      %s61 = sphi 0, %s63
      %s64 = sphi 0, %s61
      %s65 = sphi 0, %s64
      %s81 = sphi 0, %s65
      %s87 = sphi 0, %s89
      %s90 = sphi 0, %s87
      %s91 = sphi 0, %s90
      %s107 = sphi 0, %s91
      %s113 = sphi 0, %s115
      %s116 = sphi 0, %s113
      %s117 = sphi 0, %s116
      %s133 = sphi 0, %s117
    $region4: #{tpu_custom_call.1} parent=1 // loop_header_branch
      %19 = sbr.rel (%p17) target = $region8
    $region5: #{tpu_custom_call.1} parent=1 // loop_body
      %s21 = ssub.s32 %s16, 1
      %s22 = ssub.s32 %s16, 2
      %s29 = sadd.s32 1, %s24
      %p30 = scmp.ge.s32.totalorder %s29, 1
      %s31 = scalar_select %p30, 0, %s29
      %s32 = sadd.s32 1, %s23
      %s33 = scalar_select %p30, %s32, %s23
      %p34 = scmp.ge.s32.totalorder %s33, 2
      %s35 = scalar_select %p34, 0, %s33
      %s37 = sadd.s32 %s36, 1
      %p40 = scmp.eq.s32.totalorder %s16, 1
      %p41 = scmp.ne.s32.totalorder %s36, %s38
      %p42 = scmp.eq.s32.totalorder %s16, 0
      %p43 = por %p41, %p42
      %p44 = scmp.ne.s32.totalorder %s36, %s38
      %p45 = scmp.eq.s32.totalorder %s21, 1
      %p46 = por %p44, %p45
      %p47 = scmp.ne.s32.totalorder %s38, %s39
      %p48 = scmp.eq.s32.totalorder %s21, 0
      %p49 = por %p47, %p48
      %p50 = scmp.ne.s32.totalorder %s38, %s39
      %p51 = scmp.eq.s32.totalorder %s22, 1
      %p52 = por %p50, %p51
      %p54 = scmp.ne.s32.totalorder %s39, %s53
      %p55 = scmp.eq.s32.totalorder %s22, 0
      %p56 = por %p54, %p55
      %s57 = ssub.s32 %s24, %s31
      %s58 = ssub.s32 %s23, %s35
      %s59 = sor.u32 %s57, %s58
      %p60 = scmp.eq.s32.totalorder %s59, 0
      %s62 = sadd.s32 %s61, 1
      %s63 = scalar_select %p60, %s61, %s62
      %p66 = pneg %p60
      %p67 = scmp.eq.s32.totalorder %s16, 1
      %p68 = por %p66, %p67
      %p69 = scmp.ne.s32.totalorder %s61, %s64
      %p70 = scmp.eq.s32.totalorder %s16, 0
      %p71 = por %p69, %p70
      %p72 = scmp.ne.s32.totalorder %s61, %s64
      %p73 = scmp.eq.s32.totalorder %s21, 1
      %p74 = por %p72, %p73
      %p75 = scmp.ne.s32.totalorder %s64, %s65
      %p76 = scmp.eq.s32.totalorder %s21, 0
      %p77 = por %p75, %p76
      %p78 = scmp.ne.s32.totalorder %s64, %s65
      %p79 = scmp.eq.s32.totalorder %s22, 1
      %p80 = por %p78, %p79
      %p82 = scmp.ne.s32.totalorder %s65, %s81
      %p83 = scmp.eq.s32.totalorder %s22, 0
      %p84 = por %p82, %p83
      %s85 = ssub.s32 %s23, %s35
      %p86 = scmp.eq.s32.totalorder %s85, 0
      %s88 = sadd.s32 %s87, 1
      %s89 = scalar_select %p86, %s87, %s88
      %p92 = pneg %p86
      %p93 = scmp.eq.s32.totalorder %s16, 1
      %p94 = por %p92, %p93
      %p95 = scmp.ne.s32.totalorder %s87, %s90
      %p96 = scmp.eq.s32.totalorder %s16, 0
      %p97 = por %p95, %p96
      %p98 = scmp.ne.s32.totalorder %s87, %s90
      %p99 = scmp.eq.s32.totalorder %s21, 1
      %p100 = por %p98, %p99
      %p101 = scmp.ne.s32.totalorder %s90, %s91
      %p102 = scmp.eq.s32.totalorder %s21, 0
      %p103 = por %p101, %p102
      %p104 = scmp.ne.s32.totalorder %s90, %s91
      %p105 = scmp.eq.s32.totalorder %s22, 1
      %p106 = por %p104, %p105
      %p108 = scmp.ne.s32.totalorder %s91, %s107
      %p109 = scmp.eq.s32.totalorder %s22, 0
      %p110 = por %p108, %p109
      %s111 = ssub.s32 %s23, %s35
      %p112 = scmp.eq.s32.totalorder %s111, 0
      %s114 = sadd.s32 %s113, 1
      %s115 = scalar_select %p112, %s113, %s114
      %p118 = pneg %p112
      %p119 = scmp.eq.s32.totalorder %s16, 1
      %p120 = por %p118, %p119
      %p121 = scmp.ne.s32.totalorder %s113, %s116
      %p122 = scmp.eq.s32.totalorder %s16, 0
      %p123 = por %p121, %p122
      %p124 = scmp.ne.s32.totalorder %s113, %s116
      %p125 = scmp.eq.s32.totalorder %s21, 1
      %p126 = por %p124, %p125
      %p127 = scmp.ne.s32.totalorder %s116, %s117
      %p128 = scmp.eq.s32.totalorder %s21, 0
      %p129 = por %p127, %p128
      %p130 = scmp.ne.s32.totalorder %s116, %s117
      %p131 = scmp.eq.s32.totalorder %s22, 1
      %p132 = por %p130, %p131
      %p134 = scmp.ne.s32.totalorder %s117, %s133
      %p135 = scmp.eq.s32.totalorder %s22, 0
      %p136 = por %p134, %p135
      %p137 = scmp.le.s32.totalorder 1, %s16
      %p138 = scmp.lt.s32.totalorder %s16, 3
      %p139 = pnand %p137, %p138
      %p140 = pneg %p139
      // Predicated region
      $region9: #{tpu_custom_call.1} parent=5 // pred_check
        _
      $region10: #{tpu_custom_call.1} parent=5 // pred_check_branch
        %142 = sbr.rel (%p139) target = $region12
      $region11: #{tpu_custom_call.1} parent=5 // pred_region
        %s143 = ssub.s32 %s16, 1
        // Predicated region
        $region13: #{tpu_custom_call.1} parent=11 // pred_check
          %p144 = pneg %p49
        $region14: #{tpu_custom_call.1} parent=11 // pred_check_branch
          %146 = sbr.rel (%p144) target = $region16
        $region15: #{tpu_custom_call.1} parent=11 // pred_region
          %s148 = ssub.s32 128, 128
          %149 = vsyncadd [#allocation3], %s148
          %s151 = sshll.u32 [#allocation2], 4
          %s152 = int_to_ptr.vmem [resolvable:$true] %s151
          %154 = dma.hbm_to_vmem [thread:$0]  %s0, 128, %s152, [#allocation3]
        $region16: #{tpu_custom_call.1} parent=11 // pred_fallthru
          _
      $region12: #{tpu_custom_call.1} parent=5 // pred_fallthru
        _
      %p155 = scmp.lt.s32.totalorder %s16, 2
      // Predicated region
      $region17: #{tpu_custom_call.1} parent=5 // pred_check
        %p156 = pneg %p155
      $region18: #{tpu_custom_call.1} parent=5 // pred_check_branch
        %158 = sbr.rel (%p156) target = $region20
      $region19: #{tpu_custom_call.1} parent=5 // pred_region
        // Predicated region
        $region21: #{tpu_custom_call.1} parent=19 // pred_check
          %p159 = pneg %p71
        $region22: #{tpu_custom_call.1} parent=19 // pred_check_branch
          %161 = sbr.rel (%p159) target = $region24
        $region23: #{tpu_custom_call.1} parent=19 // pred_region
          %s162 = sand.u32 %s61, 1
          %s163 = scalar_lea.sflag [#allocation6], %s162
          %s164 = sand.u32 %s61, 1
          %s165 = smul.addr %s164, 256
          %s166 = scalar_lea.vmem [#allocation5], %s165
          %s167 = smul.u32 32, %s24
          %s169 = ssub.s32 4096, 4096
          %170 = vsyncadd %s163, %s169
          %s171 = smul.addr %s167, 2
          %s172 = sadd.s32 %s23, %s171
          %s173 = smul.addr %s172, 128
          %s174 = scalar_lea.hbm %s1, %s173
          %s175 = sshll.u32 %s166, 4
          %s176 = int_to_ptr.vmem [resolvable:$true] %s175
          %181 = dma.hbm_to_vmem [thread:$0]  %s174, 4096, %s176, %s163, 256, 128, 8
        $region24: #{tpu_custom_call.1} parent=19 // pred_fallthru
          _
        // Predicated region
        $region25: #{tpu_custom_call.1} parent=19 // pred_check
          %p182 = pneg %p97
        $region26: #{tpu_custom_call.1} parent=19 // pred_check_branch
          %184 = sbr.rel (%p182) target = $region28
        $region27: #{tpu_custom_call.1} parent=19 // pred_region
          %p185 = scmp.lt.s32.totalorder %s23, 1
          %s186 = scalar_select %p185, %s23, 1
          %s187 = scalar_lea.vmem %s2, %s186
        $region28: #{tpu_custom_call.1} parent=19 // pred_fallthru
          _
      $region20: #{tpu_custom_call.1} parent=5 // pred_fallthru
        _
      %p188 = scmp.le.s32.totalorder 1, %s16
      %p189 = scmp.lt.s32.totalorder %s16, 3
      %p190 = pnand %p188, %p189
      %p191 = pneg %p190
      // Predicated region
      $region29: #{tpu_custom_call.1} parent=5 // pred_check
        _
      $region30: #{tpu_custom_call.1} parent=5 // pred_check_branch
        %193 = sbr.rel (%p190) target = $region32
      $region31: #{tpu_custom_call.1} parent=5 // pred_region
        %s194 = ssub.s32 %s16, 1
        // Predicated region
        $region33: #{tpu_custom_call.1} parent=31 // pred_check
          %p195 = pneg %p49
        $region34: #{tpu_custom_call.1} parent=31 // pred_check_branch
          %197 = sbr.rel (%p195) target = $region36
        $region35: #{tpu_custom_call.1} parent=31 // pred_region
          %198 = dma.done [#allocation3], 128
        $region36: #{tpu_custom_call.1} parent=31 // pred_fallthru
          _
        %s199 = sand.u32 %s64, 1
        %s200 = scalar_lea.sflag [#allocation6], %s199
        %s201 = sand.u32 %s64, 1
        %s202 = smul.addr %s201, 256
        %s203 = scalar_lea.vmem [#allocation5], %s202
        // Predicated region
        $region37: #{tpu_custom_call.1} parent=31 // pred_check
          %p204 = pneg %p77
        $region38: #{tpu_custom_call.1} parent=31 // pred_check_branch
          %206 = sbr.rel (%p204) target = $region40
        $region39: #{tpu_custom_call.1} parent=31 // pred_region
          %207 = dma.done %s200, 4096
        $region40: #{tpu_custom_call.1} parent=31 // pred_fallthru
          _
        %p208 = pneg %p49
        %p209 = pneg %p46
        %s210 = sand.u32 %s64, 1
        %s211 = scalar_lea.sflag [#allocation6], %s210
        %s212 = sand.u32 %s64, 1
        %s213 = smul.addr %s212, 256
        %s214 = scalar_lea.vmem [#allocation5], %s213
        %p215 = pneg %p77
        %p216 = pneg %p74
        %p217 = scmp.lt.s32.totalorder %s25, 1
        %s218 = scalar_select %p217, %s25, 1
        %s219 = scalar_lea.vmem %s2, %s218
        %p220 = pneg %p103
        %p221 = pneg %p100
        %p222 = pneg %p129
        %p223 = pneg %p126
        %s224 = sand.u32 %s116, 1
        %s225 = scalar_lea.sflag [#allocation4], %s224
        %s226 = sand.u32 %s116, 1
        %s227 = smul.addr %s226, 2
        %s228 = scalar_lea.vmem [#allocation7], %s227
        %s229 = smul.u32 32, %s26
        %p230 = scmp.lt.s32.totalorder %s25, 1
        %s231 = scalar_select %p230, %s25, 1
        %s232 = scalar_lea.vmem %s2, %s231
        %p234 = scmp.eq.s32.totalorder %s26, 0
        // Predicated region
        $region41: #{tpu_custom_call.1} parent=31 // pred_check
          %p235 = pneg %p234
        $region42: #{tpu_custom_call.1} parent=31 // pred_check_branch
          %237 = sbr.rel (%p235) target = $region44
        $region43: #{tpu_custom_call.1} parent=31 // pred_region
          %238 = vst [vmem:[%s228] sm:$0x3] 0.0
        $region44: #{tpu_custom_call.1} parent=31 // pred_fallthru
          _
        %s239 = smul.u32 %s26, 1024
        %s240 = sshra.s32 %s239, 7
        %s241 = sand.u32 %s239, 127
        %s242 = scalar_lea.vmem [#allocation2], %s240
        %v243 = vld [vmem:[%s242] sm:$0xff]
        %v244 = vld [vmem:[%s203] sm:$0xff]
        %v245 = vld [vmem:[%s203 + $0x8] sm:$0xff]
        %v246 = vld [vmem:[%s203 + $0x10] sm:$0xff]
        %v247 = vld [vmem:[%s203 + $0x18] sm:$0xff]
        %v248 = vld [vmem:[%s203 + $0x20] sm:$0xff]
        %v249 = vld [vmem:[%s203 + $0x28] sm:$0xff]
        %v250 = vld [vmem:[%s203 + $0x30] sm:$0xff]
        %v251 = vld [vmem:[%s203 + $0x38] sm:$0xff]
        %v252 = vld [vmem:[%s203 + $0x40] sm:$0xff]
        %v253 = vld [vmem:[%s203 + $0x48] sm:$0xff]
        %v254 = vld [vmem:[%s203 + $0x50] sm:$0xff]
        %v255 = vld [vmem:[%s203 + $0x58] sm:$0xff]
        %v256 = vld [vmem:[%s203 + $0x60] sm:$0xff]
        %v257 = vld [vmem:[%s203 + $0x68] sm:$0xff]
        %v258 = vld [vmem:[%s203 + $0x70] sm:$0xff]
        %v259 = vld [vmem:[%s203 + $0x78] sm:$0xff]
        %v260 = vld [vmem:[%s203 + $0x80] sm:$0xff]
        %v261 = vld [vmem:[%s203 + $0x88] sm:$0xff]
        %v262 = vld [vmem:[%s203 + $0x90] sm:$0xff]
        %v263 = vld [vmem:[%s203 + $0x98] sm:$0xff]
        %v264 = vld [vmem:[%s203 + $0xa0] sm:$0xff]
        %v265 = vld [vmem:[%s203 + $0xa8] sm:$0xff]
        %v266 = vld [vmem:[%s203 + $0xb0] sm:$0xff]
        %v267 = vld [vmem:[%s203 + $0xb8] sm:$0xff]
        %v268 = vld [vmem:[%s203 + $0xc0] sm:$0xff]
        %v269 = vld [vmem:[%s203 + $0xc8] sm:$0xff]
        %v270 = vld [vmem:[%s203 + $0xd0] sm:$0xff]
        %v271 = vld [vmem:[%s203 + $0xd8] sm:$0xff]
        %v272 = vld [vmem:[%s203 + $0xe0] sm:$0xff]
        %v273 = vld [vmem:[%s203 + $0xe8] sm:$0xff]
        %v274 = vld [vmem:[%s203 + $0xf0] sm:$0xff]
        %v275 = vld [vmem:[%s203 + $0xf8] sm:$0xff]
        %v276 = vunpack.c.l.s8.bf16 %v244
        %v277 = vunpack.c.h.s8.bf16 %v244
        %v278 = vunpack.c.l.s8.bf16 %v245
        %v279 = vunpack.c.h.s8.bf16 %v245
        %v280 = vunpack.c.l.s8.bf16 %v246
        %v281 = vunpack.c.h.s8.bf16 %v246
        %v282 = vunpack.c.l.s8.bf16 %v247
        %v283 = vunpack.c.h.s8.bf16 %v247
        %v284 = vunpack.c.l.s8.bf16 %v248
        %v285 = vunpack.c.h.s8.bf16 %v248
        %v286 = vunpack.c.l.s8.bf16 %v249
        %v287 = vunpack.c.h.s8.bf16 %v249
        %v288 = vunpack.c.l.s8.bf16 %v250
        %v289 = vunpack.c.h.s8.bf16 %v250
        %v290 = vunpack.c.l.s8.bf16 %v251
        %v291 = vunpack.c.h.s8.bf16 %v251
        %v292 = vunpack.c.l.s8.bf16 %v252
        %v293 = vunpack.c.h.s8.bf16 %v252
        %v294 = vunpack.c.l.s8.bf16 %v253
        %v295 = vunpack.c.h.s8.bf16 %v253
        %v296 = vunpack.c.l.s8.bf16 %v254
        %v297 = vunpack.c.h.s8.bf16 %v254
        %v298 = vunpack.c.l.s8.bf16 %v255
        %v299 = vunpack.c.h.s8.bf16 %v255
        %v300 = vunpack.c.l.s8.bf16 %v256
        %v301 = vunpack.c.h.s8.bf16 %v256
        %v302 = vunpack.c.l.s8.bf16 %v257
        %v303 = vunpack.c.h.s8.bf16 %v257
        %v304 = vunpack.c.l.s8.bf16 %v258
        %v305 = vunpack.c.h.s8.bf16 %v258
        %v306 = vunpack.c.l.s8.bf16 %v259
        %v307 = vunpack.c.h.s8.bf16 %v259
        %v308 = vunpack.c.l.s8.bf16 %v260
        %v309 = vunpack.c.h.s8.bf16 %v260
        %v310 = vunpack.c.l.s8.bf16 %v261
        %v311 = vunpack.c.h.s8.bf16 %v261
        %v312 = vunpack.c.l.s8.bf16 %v262
        %v313 = vunpack.c.h.s8.bf16 %v262
        %v314 = vunpack.c.l.s8.bf16 %v263
        %v315 = vunpack.c.h.s8.bf16 %v263
        %v316 = vunpack.c.l.s8.bf16 %v264
        %v317 = vunpack.c.h.s8.bf16 %v264
        %v318 = vunpack.c.l.s8.bf16 %v265
        %v319 = vunpack.c.h.s8.bf16 %v265
        %v320 = vunpack.c.l.s8.bf16 %v266
        %v321 = vunpack.c.h.s8.bf16 %v266
        %v322 = vunpack.c.l.s8.bf16 %v267
        %v323 = vunpack.c.h.s8.bf16 %v267
        %v324 = vunpack.c.l.s8.bf16 %v268
        %v325 = vunpack.c.h.s8.bf16 %v268
        %v326 = vunpack.c.l.s8.bf16 %v269
        %v327 = vunpack.c.h.s8.bf16 %v269
        %v328 = vunpack.c.l.s8.bf16 %v270
        %v329 = vunpack.c.h.s8.bf16 %v270
        %v330 = vunpack.c.l.s8.bf16 %v271
        %v331 = vunpack.c.h.s8.bf16 %v271
        %v332 = vunpack.c.l.s8.bf16 %v272
        %v333 = vunpack.c.h.s8.bf16 %v272
        %v334 = vunpack.c.l.s8.bf16 %v273
        %v335 = vunpack.c.h.s8.bf16 %v273
        %v336 = vunpack.c.l.s8.bf16 %v274
        %v337 = vunpack.c.h.s8.bf16 %v274
        %v338 = vunpack.c.l.s8.bf16 %v275
        %v339 = vunpack.c.h.s8.bf16 %v275
        %v340 = vld [vmem:[%s228] sm:$0x3]
        %v342 = vcombine.high %v243, %v243
        %v344 = vunpack.c.l.s4 1966171168
        %v345 = vunpack.c.0.s8 %v344
        %v346 = vlaneseq
        %v347 = vshrl.u32 %v346, 7
        %v348 = vsub.s32 %v345, %v347
        %v349 = vrot.slane %v243, %v348
        %v351 = vunpack.c.l.s4 1966171168
        %v352 = vunpack.c.0.s8 %v351
        %v353 = vlaneseq
        %v354 = vshrl.u32 %v353, 7
        %v355 = vsub.s32 %v352, %v354
        %v356 = vrot.slane %v342, %v355
        %v357 = vcombine.high %v349, %v349
        %v358 = vcombine.high %v356, %v356
        %v360 = vunpack.c.l.s4 1966171168
        %v361 = vunpack.c.0.s8 %v360
        %v362 = vlaneseq
        %v363 = vshrl.u32 %v362, 7
        %v364 = vsub.s32 %v361, %v363
        %v365 = vrot.slane %v349, %v364
        %v367 = vunpack.c.l.s4 1966171168
        %v368 = vunpack.c.0.s8 %v367
        %v369 = vlaneseq
        %v370 = vshrl.u32 %v369, 7
        %v371 = vsub.s32 %v368, %v370
        %v372 = vrot.slane %v356, %v371
        %v374 = vunpack.c.l.s4 1966171168
        %v375 = vunpack.c.0.s8 %v374
        %v376 = vlaneseq
        %v377 = vshrl.u32 %v376, 7
        %v378 = vsub.s32 %v375, %v377
        %v379 = vrot.slane %v357, %v378
        %v381 = vunpack.c.l.s4 1966171168
        %v382 = vunpack.c.0.s8 %v381
        %v383 = vlaneseq
        %v384 = vshrl.u32 %v383, 7
        %v385 = vsub.s32 %v382, %v384
        %v386 = vrot.slane %v358, %v385
        %v387 = vcombine.high %v365, %v365
        %v388 = vcombine.high %v372, %v372
        %v389 = vcombine.high %v379, %v379
        %v390 = vcombine.high %v386, %v386
        %399 = vmatprep.subr.bf16.mxu0 0
        %400 = vmatpush1.bf16.msra.mxu0 %v276
        %401 = vmatprep.subr.bf16.mxu0 0
        %402 = vmatpush1.bf16.msra.mxu0 %v277
        %403 = vmatprep.subr.bf16.mxu0 0
        %404 = vmatpush1.bf16.msra.mxu0 %v278
        %405 = vmatprep.subr.bf16.mxu0 0
        %406 = vmatpush1.bf16.msra.mxu0 %v279
        %407 = vmatprep.subr.bf16.mxu0 0
        %408 = vmatpush1.bf16.msra.mxu0 %v280
        %409 = vmatprep.subr.bf16.mxu0 0
        %410 = vmatpush1.bf16.msra.mxu0 %v281
        %411 = vmatprep.subr.bf16.mxu0 0
        %412 = vmatpush1.bf16.msra.mxu0 %v282
        %413 = vmatprep.subr.bf16.mxu0 0
        %414 = vmatpush1.bf16.msra.mxu0 %v283
        %415 = vmatprep.subr.bf16.mxu0 0
        %416 = vmatpush1.bf16.msra.mxu0 %v284
        %417 = vmatprep.subr.bf16.mxu0 0
        %418 = vmatpush1.bf16.msra.mxu0 %v285
        %419 = vmatprep.subr.bf16.mxu0 0
        %420 = vmatpush1.bf16.msra.mxu0 %v286
        %421 = vmatprep.subr.bf16.mxu0 0
        %422 = vmatpush1.bf16.msra.mxu0 %v287
        %423 = vmatprep.subr.bf16.mxu0 0
        %424 = vmatpush1.bf16.msra.mxu0 %v288
        %425 = vmatprep.subr.bf16.mxu0 0
        %426 = vmatpush1.bf16.msra.mxu0 %v289
        %427 = vmatprep.subr.bf16.mxu0 0
        %428 = vmatpush1.bf16.msra.mxu0 %v290
        %429 = vmatprep.subr.bf16.mxu0 0
        %430 = vmatpush1.bf16.msra.mxu0 %v291
        %431 = vmatprep.mubr.bf16.mxu0 %v379
        %432 = vmatmul.mubr.bf16.gmra.mrb[0].mxu0 %v365
        %v433 = vpop.f32.mrb[0].mxu0
        %v434 = vadd.f32 0.0, %v433
        %v435 = vpop.f32.mrb[0].mxu0
        %v436 = vpop.f32.mrb[0].mxu0
        %v437 = vpop.f32.mrb[0].mxu0
        %438 = vdwg.mxu0
        %439 = vmatprep.subr.bf16.mxu0 0
        %440 = vmatpush1.bf16.msra.mxu0 %v292
        %441 = vmatprep.subr.bf16.mxu0 0
        %442 = vmatpush1.bf16.msra.mxu0 %v293
        %443 = vmatprep.subr.bf16.mxu0 0
        %444 = vmatpush1.bf16.msra.mxu0 %v294
        %445 = vmatprep.subr.bf16.mxu0 0
        %446 = vmatpush1.bf16.msra.mxu0 %v295
        %447 = vmatprep.subr.bf16.mxu0 0
        %448 = vmatpush1.bf16.msra.mxu0 %v296
        %449 = vmatprep.subr.bf16.mxu0 0
        %450 = vmatpush1.bf16.msra.mxu0 %v297
        %451 = vmatprep.subr.bf16.mxu0 0
        %452 = vmatpush1.bf16.msra.mxu0 %v298
        %453 = vmatprep.subr.bf16.mxu0 0
        %454 = vmatpush1.bf16.msra.mxu0 %v299
        %455 = vmatprep.subr.bf16.mxu0 0
        %456 = vmatpush1.bf16.msra.mxu0 %v300
        %457 = vmatprep.subr.bf16.mxu0 0
        %458 = vmatpush1.bf16.msra.mxu0 %v301
        %459 = vmatprep.subr.bf16.mxu0 0
        %460 = vmatpush1.bf16.msra.mxu0 %v302
        %461 = vmatprep.subr.bf16.mxu0 0
        %462 = vmatpush1.bf16.msra.mxu0 %v303
        %463 = vmatprep.subr.bf16.mxu0 0
        %464 = vmatpush1.bf16.msra.mxu0 %v304
        %465 = vmatprep.subr.bf16.mxu0 0
        %466 = vmatpush1.bf16.msra.mxu0 %v305
        %467 = vmatprep.subr.bf16.mxu0 0
        %468 = vmatpush1.bf16.msra.mxu0 %v306
        %469 = vmatprep.subr.bf16.mxu0 0
        %470 = vmatpush1.bf16.msra.mxu0 %v307
        %471 = vmatprep.mubr.bf16.mxu0 %v389
        %472 = vmatmul.mubr.bf16.gmra.mrb[0].mxu0 %v387
        %v473 = vpop.f32.mrb[0].mxu0
        %v474 = vadd.f32 %v434, %v473
        %v475 = vpop.f32.mrb[0].mxu0
        %v476 = vpop.f32.mrb[0].mxu0
        %v477 = vpop.f32.mrb[0].mxu0
        %478 = vdwg.mxu0
        %479 = vmatprep.subr.bf16.mxu0 0
        %480 = vmatpush1.bf16.msra.mxu0 %v308
        %481 = vmatprep.subr.bf16.mxu0 0
        %482 = vmatpush1.bf16.msra.mxu0 %v309
        %483 = vmatprep.subr.bf16.mxu0 0
        %484 = vmatpush1.bf16.msra.mxu0 %v310
        %485 = vmatprep.subr.bf16.mxu0 0
        %486 = vmatpush1.bf16.msra.mxu0 %v311
        %487 = vmatprep.subr.bf16.mxu0 0
        %488 = vmatpush1.bf16.msra.mxu0 %v312
        %489 = vmatprep.subr.bf16.mxu0 0
        %490 = vmatpush1.bf16.msra.mxu0 %v313
        %491 = vmatprep.subr.bf16.mxu0 0
        %492 = vmatpush1.bf16.msra.mxu0 %v314
        %493 = vmatprep.subr.bf16.mxu0 0
        %494 = vmatpush1.bf16.msra.mxu0 %v315
        %495 = vmatprep.subr.bf16.mxu0 0
        %496 = vmatpush1.bf16.msra.mxu0 %v316
        %497 = vmatprep.subr.bf16.mxu0 0
        %498 = vmatpush1.bf16.msra.mxu0 %v317
        %499 = vmatprep.subr.bf16.mxu0 0
        %500 = vmatpush1.bf16.msra.mxu0 %v318
        %501 = vmatprep.subr.bf16.mxu0 0
        %502 = vmatpush1.bf16.msra.mxu0 %v319
        %503 = vmatprep.subr.bf16.mxu0 0
        %504 = vmatpush1.bf16.msra.mxu0 %v320
        %505 = vmatprep.subr.bf16.mxu0 0
        %506 = vmatpush1.bf16.msra.mxu0 %v321
        %507 = vmatprep.subr.bf16.mxu0 0
        %508 = vmatpush1.bf16.msra.mxu0 %v322
        %509 = vmatprep.subr.bf16.mxu0 0
        %510 = vmatpush1.bf16.msra.mxu0 %v323
        %511 = vmatprep.mubr.bf16.mxu0 %v386
        %512 = vmatmul.mubr.bf16.gmra.mrb[0].mxu0 %v372
        %v513 = vpop.f32.mrb[0].mxu0
        %v514 = vadd.f32 %v474, %v513
        %v515 = vpop.f32.mrb[0].mxu0
        %v516 = vpop.f32.mrb[0].mxu0
        %v517 = vpop.f32.mrb[0].mxu0
        %518 = vdwg.mxu0
        %519 = vmatprep.subr.bf16.mxu0 0
        %520 = vmatpush1.bf16.msra.mxu0 %v324
        %521 = vmatprep.subr.bf16.mxu0 0
        %522 = vmatpush1.bf16.msra.mxu0 %v325
        %523 = vmatprep.subr.bf16.mxu0 0
        %524 = vmatpush1.bf16.msra.mxu0 %v326
        %525 = vmatprep.subr.bf16.mxu0 0
        %526 = vmatpush1.bf16.msra.mxu0 %v327
        %527 = vmatprep.subr.bf16.mxu0 0
        %528 = vmatpush1.bf16.msra.mxu0 %v328
        %529 = vmatprep.subr.bf16.mxu0 0
        %530 = vmatpush1.bf16.msra.mxu0 %v329
        %531 = vmatprep.subr.bf16.mxu0 0
        %532 = vmatpush1.bf16.msra.mxu0 %v330
        %533 = vmatprep.subr.bf16.mxu0 0
        %534 = vmatpush1.bf16.msra.mxu0 %v331
        %535 = vmatprep.subr.bf16.mxu0 0
        %536 = vmatpush1.bf16.msra.mxu0 %v332
        %537 = vmatprep.subr.bf16.mxu0 0
        %538 = vmatpush1.bf16.msra.mxu0 %v333
        %539 = vmatprep.subr.bf16.mxu0 0
        %540 = vmatpush1.bf16.msra.mxu0 %v334
        %541 = vmatprep.subr.bf16.mxu0 0
        %542 = vmatpush1.bf16.msra.mxu0 %v335
        %543 = vmatprep.subr.bf16.mxu0 0
        %544 = vmatpush1.bf16.msra.mxu0 %v336
        %545 = vmatprep.subr.bf16.mxu0 0
        %546 = vmatpush1.bf16.msra.mxu0 %v337
        %547 = vmatprep.subr.bf16.mxu0 0
        %548 = vmatpush1.bf16.msra.mxu0 %v338
        %549 = vmatprep.subr.bf16.mxu0 0
        %550 = vmatpush1.bf16.msra.mxu0 %v339
        %551 = vmatprep.mubr.bf16.mxu0 %v390
        %552 = vmatmul.mubr.bf16.gmra.mrb[0].mxu0 %v388
        %v553 = vpop.f32.mrb[0].mxu0
        %v554 = vadd.f32 %v514, %v553
        %v555 = vpop.f32.mrb[0].mxu0
        %v556 = vpop.f32.mrb[0].mxu0
        %v557 = vpop.f32.mrb[0].mxu0
        %558 = vdwg.mxu0
        %v559 = vadd.f32 %v340, %v554
        %560 = vst [vmem:[%s228] sm:$0x3] %v559
        // Predicated region
        $region45: #{tpu_custom_call.1} parent=31 // pred_check
          %p561 = pneg %p234
        $region46: #{tpu_custom_call.1} parent=31 // pred_check_branch
          %563 = sbr.rel (%p561) target = $region48
        $region47: #{tpu_custom_call.1} parent=31 // pred_region
          %v564 = vld [vmem:[%s228] sm:$0x3]
          %v565 = vld [vmem:[%s232] sm:$0x1]
          %v567 = vlaneseq
          %v568 = vshrl.u32 %v567, 7
          %v569 = vsub.s32 0, %v568
          %v570 = vrot.slane %v565, %v569
          %v572 = vmul.f32 %v564, %v570
          %573 = vst [vmem:[%s228] sm:$0x3] %v572
        $region48: #{tpu_custom_call.1} parent=31 // pred_fallthru
          _
        %s574 = sand.u32 %s116, 1
        %s575 = scalar_lea.sflag [#allocation4], %s574
        %s576 = sand.u32 %s116, 1
        %s577 = smul.addr %s576, 2
        %s578 = scalar_lea.vmem [#allocation7], %s577
        // Predicated region
        $region49: #{tpu_custom_call.1} parent=31 // pred_check
          %p579 = pneg %p126
        $region50: #{tpu_custom_call.1} parent=31 // pred_check_branch
          %581 = sbr.rel (%p579) target = $region52
        $region51: #{tpu_custom_call.1} parent=31 // pred_region
          %s583 = ssub.s32 32, 32
          %584 = vsyncadd %s575, %s583
          %s585 = smul.addr %s25, 32
          %s586 = scalar_lea.hbm %s3, %s585
          %s588 = sshll.u32 %s578, 4
          %s589 = int_to_ptr.vmem [resolvable:$true] %s588
          %591 = dma.vmem_to_hbm [thread:$0]  %s589, 32, %s586, %s575
        $region52: #{tpu_custom_call.1} parent=31 // pred_fallthru
          _
      $region32: #{tpu_custom_call.1} parent=5 // pred_fallthru
        _
      %p592 = scmp.le.s32.totalorder 2, %s16
      // Predicated region
      $region53: #{tpu_custom_call.1} parent=5 // pred_check
        %p593 = pneg %p592
      $region54: #{tpu_custom_call.1} parent=5 // pred_check_branch
        %595 = sbr.rel (%p593) target = $region56
      $region55: #{tpu_custom_call.1} parent=5 // pred_region
        %s596 = ssub.s32 %s16, 2
        // Predicated region
        $region57: #{tpu_custom_call.1} parent=55 // pred_check
          %p597 = pneg %p132
        $region58: #{tpu_custom_call.1} parent=55 // pred_check_branch
          %599 = sbr.rel (%p597) target = $region60
        $region59: #{tpu_custom_call.1} parent=55 // pred_region
          %s600 = sand.u32 %s117, 1
          %s601 = scalar_lea.sflag [#allocation4], %s600
          %s602 = sand.u32 %s117, 1
          %s603 = smul.addr %s602, 2
          %s604 = scalar_lea.vmem [#allocation7], %s603
          %605 = dma.done %s601, 32
        $region60: #{tpu_custom_call.1} parent=55 // pred_fallthru
          _
      $region56: #{tpu_custom_call.1} parent=5 // pred_fallthru
        _
    $region6: #{tpu_custom_call.1} parent=1 // loop_footer
      %s20 = sadd.s32 1, %s16
    $region7: #{tpu_custom_call.1} parent=1 // loop_footer_branch
      %15 = sbr.rel target = $region3
    $region8: #{tpu_custom_call.1} parent=1 // loop_exit
      _
    %606 = vsyncpa [#allocation3], 1
    %s607 = scalar_lea.sflag [#allocation3], 1
    %608 = vsyncpa %s607, 1
    %609 = vsyncpa [#allocation6], 1
    %s610 = scalar_lea.sflag [#allocation6], 1
    %611 = vsyncpa %s610, 1
    %612 = vsyncpa [#allocation4], 1
    %s613 = scalar_lea.sflag [#allocation4], 1
    %614 = vsyncpa %s613, 1

</llo_original>
